<compile_context>
chip_gen: v7x
topology: tpu7x:2x2x1
jax: 0.10.0
libtpu: 0.0.40
codegen_flags: <defaults>
</compile_context>

<pallas_src>
import math

import jax
import jax.numpy as jnp
from jax import lax
from jax.experimental import pallas as pl
from jax.experimental.pallas import tpu as pltpu

_INV_SQRT2 = 1.0 / math.sqrt(2.0)

# Exact erf GELU matches PyTorch nn.GELU() numerics (default).  Set True to route
# the activation through the EUP (tanh approx) instead of a VALU erf polynomial.
_USE_TANH_GELU = False


def _physical_vmem_bytes():
    try:
        info = pltpu.get_tpu_info()
        for attr in ("vmem_capacity_bytes", "vmem_bytes", "vmem_size_bytes"):
            v = getattr(info, attr, None)
            if v:
                return int(v)
    except Exception:
        pass
    return 64 * 1024 * 1024  # conservative (v7x-sized) fallback


_VMEM_PHYS = _physical_vmem_bytes()
_BIG_VMEM = _VMEM_PHYS >= 100 * 1024 * 1024                 # v5e / v6e (128 MiB)
_VMEM_LIMIT = (100 if _BIG_VMEM else 48) * 1024 * 1024

# Matmul tile candidates (descending; first divisor wins, so 512/256 are picked
# ahead of 128 — v6e/v7x MXU is 2x256^2; v5e still gets 128-multiples).
if _BIG_VMEM:
    _TM_CANDS = (512, 256, 128)
    _TN_CANDS = (1024, 512, 256, 128)
    _TK_CANDS = (1024, 512, 256, 128)
else:  # v7x: 64 MiB VMEM
    _TM_CANDS = (256, 128)
    _TN_CANDS = (512, 256, 128)
    _TK_CANDS = (512, 256, 128)


def _tile_and_pad(dim, candidates):
    """Pick a tile for `dim`.  Returns (tile, padded_dim)."""
    if dim <= candidates[-1]:
        return dim, dim                      # single full-extent block
    for c in candidates:
        if dim % c == 0:
            return c, dim
    t = candidates[-1]                       # ragged: pad up to a tile multiple
    return t, ((dim + t - 1) // t) * t


# ----------------------------------------------------------------------------
# Kernel 1: tiled Linear (bf16 MXU operands, f32 VMEM accumulator, bias epilogue)
# ----------------------------------------------------------------------------
def _linear_kernel(x_ref, w_ref, b_ref, o_ref, acc_ref):
    k = pl.program_id(2)

    @pl.when(k == 0)
    def _():
        acc_ref[...] = jnp.zeros_like(acc_ref)

    # bf16 operands on the MXU, f32 accumulation in the VMEM scratch.
    acc_ref[...] += jnp.dot(x_ref[...], w_ref[...],
                            preferred_element_type=jnp.float32)

    @pl.when(k == pl.num_programs(2) - 1)
    def _():
        o_ref[...] = (acc_ref[...] + b_ref[...].astype(jnp.float32)).astype(o_ref.dtype)


def linear(x2d, w, b, out_dtype=jnp.float32):
    """y = x @ w + b, bf16 MXU operands with f32 accumulation."""
    M, K = x2d.shape
    N = w.shape[1]
    tm, Mp = _tile_and_pad(M, _TM_CANDS)
    tn, Np = _tile_and_pad(N, _TN_CANDS)
    tk, Kp = _tile_and_pad(K, _TK_CANDS)

    # v7x megacore: try to expose >= 2 parallel blocks for the 2 TensorCores.
    if not _BIG_VMEM and (Mp // tm) * (Np // tn) < 2:
        if tm >= 256 and Mp % (tm // 2) == 0:
            tm //= 2
        elif tn >= 256 and Np % (tn // 2) == 0:
            tn //= 2

    xb = x2d.astype(jnp.bfloat16)
    wb = w.astype(jnp.bfloat16)
    bb = b.reshape(1, N).astype(jnp.float32)
    if (Mp, Kp) != (M, K):
        xb = jnp.pad(xb, ((0, Mp - M), (0, Kp - K)))
    if (Kp, Np) != (K, N):
        wb = jnp.pad(wb, ((0, Kp - K), (0, Np - N)))
    if Np != N:
        bb = jnp.pad(bb, ((0, 0), (0, Np - N)))

    out = pl.pallas_call(
        _linear_kernel,
        out_shape=jax.ShapeDtypeStruct((Mp, Np), out_dtype),
        grid=(Mp // tm, Np // tn, Kp // tk),
        in_specs=[
            pl.BlockSpec((tm, tk), lambda i, j, k: (i, k)),
            pl.BlockSpec((tk, tn), lambda i, j, k: (k, j)),
            pl.BlockSpec((1, tn), lambda i, j, k: (0, j)),
        ],
        out_specs=pl.BlockSpec((tm, tn), lambda i, j, k: (i, j)),
        scratch_shapes=[pltpu.VMEM((tm, tn), jnp.float32)],
        compiler_params=pltpu.CompilerParams(
            dimension_semantics=("parallel", "parallel", "arbitrary"),
            vmem_limit_bytes=_VMEM_LIMIT,
        ),
    )(xb, wb, bb)
    if (Mp, Np) != (M, N):
        out = out[:M, :N]
    return out


# ----------------------------------------------------------------------------
# Kernel 2 (FUSED): depthwise 3x3 conv (zero-pad 1, groups=C) + bias + GELU,
# immediately consumed by fc2's matmul over the hidden-channel (K) grid axis.
# Conv stays on a flat (H*W, C-block) layout; taps are XLU rolls + 0/1 masks.
# ----------------------------------------------------------------------------
def _make_conv_gelu_fc2_kernel(H, W):
    HW = H * W

    def kernel(h_ref, wdw_ref, bdw_ref, w2_ref, b2_ref, o_ref, acc_ref):
        k = pl.program_id(2)

        @pl.when(k == 0)
        def _():
            acc_ref[...] = jnp.zeros_like(acc_ref)

        xf = h_ref[0].astype(jnp.float32)               # (H*W, Ct): channels on lanes
        Ct = xf.shape[-1]

        # 0/1 border masks (per spatial position, broadcast over channel lanes),
        # hoisted out of the 3x3 tap loop; mask-mul folds into the MAC stream.
        pos = lax.broadcasted_iota(jnp.int32, (HW, 1), 0)
        col = pos % W
        row = pos // W
        m_l = (col > 0).astype(jnp.float32)             # w-1 in range
        m_r = (col < W - 1).astype(jnp.float32)         # w+1 in range
        m_u = (row > 0).astype(jnp.float32)             # h-1 in range
        m_d = (row < H - 1).astype(jnp.float32)         # h+1 in range

        # W-axis taps: XLU sublane rolls on the flat layout; values that wrap
        # across rows land exactly on the masked border columns.
        x_l = pltpu.roll(xf, 1, 0) * m_l                # x[h, w-1]
        x_r = pltpu.roll(xf, HW - 1, 0) * m_r           # x[h, w+1]
        xcols = (x_l, xf, x_r)                          # indexed by dx

        conv = jnp.zeros((HW, Ct), jnp.float32)
        for dy in range(3):
            for dx in range(3):
                t = xcols[dx]
                if dy == 0:                             # x[h-1, w+dx-1]
                    t = pltpu.roll(t, W, 0) * m_u
                elif dy == 2:                           # x[h+1, w+dx-1]
                    t = pltpu.roll(t, HW - W, 0) * m_d
                conv = conv + t * wdw_ref[dy, dx, :].astype(jnp.float32)

        y = conv + bdw_ref[0, :].astype(jnp.float32)
        if _USE_TANH_GELU:
            c = math.sqrt(2.0 / math.pi)
            g = 0.5 * y * (1.0 + jnp.tanh(c * (y + 0.044715 * y * y * y)))
        else:
            g = 0.5 * y * (1.0 + lax.erf(y * _INV_SQRT2))   # exact (PyTorch default)

        # fc2 partial product for this hidden-channel block (bf16 MXU, f32 acc).
        acc_ref[...] += jnp.dot(g.astype(jnp.bfloat16), w2_ref[...],
                                preferred_element_type=jnp.float32)

        @pl.when(k == pl.num_programs(2) - 1)
        def _():
            o_ref[0] = (acc_ref[...] + b2_ref[...].astype(jnp.float32)).astype(o_ref.dtype)

    return kernel


def conv_gelu_fc2(h, wdw, bdw, w2, b2, H, W, out_dtype=jnp.float32):
    """Fused depthwise 3x3 conv (pad 1) + bias + GELU + fc2 (matmul + bias).

    h: (B, H*W, C_hidden) f32;  wdw: (3, 3, C_hidden);  w2: (C_hidden, C_out).
    """
    B, HW, Ch = h.shape
    Nout = w2.shape[1]

    # Channel-block size: budget ~10 live f32 (H*W, tk) temporaries in the body
    # (keeps v7x's 64 MiB VMEM happy while allowing larger blocks on v5e/v6e).
    tk_cands = tuple(c for c in _TK_CANDS
                     if HW * c * 4 * 10 <= _VMEM_LIMIT // 2) or (128,)
    tn_cands = tuple(c for c in _TN_CANDS
                     if HW * c * 4 * 3 <= _VMEM_LIMIT // 3) or (128,)
    tk, Kp = _tile_and_pad(Ch, tk_cands)
    tn, Np = _tile_and_pad(Nout, tn_cands)   # bigger tn = fewer conv recomputes

    hb = h.astype(jnp.float32)
    wdwb = wdw.astype(jnp.float32)
    bdwb = bdw.reshape(1, Ch).astype(jnp.float32)
    w2b = w2.astype(jnp.bfloat16)
    b2b = b2.reshape(1, Nout).astype(jnp.float32)
    if Kp != Ch:                              # zero channel padding is exact
        hb = jnp.pad(hb, ((0, 0), (0, 0), (0, Kp - Ch)))
        wdwb = jnp.pad(wdwb, ((0, 0), (0, 0), (0, Kp - Ch)))
        bdwb = jnp.pad(bdwb, ((0, 0), (0, Kp - Ch)))
        w2b = jnp.pad(w2b, ((0, Kp - Ch), (0, 0)))
    if Np != Nout:
        w2b = jnp.pad(w2b, ((0, 0), (0, Np - Nout)))
        b2b = jnp.pad(b2b, ((0, 0), (0, Np - Nout)))

    kernel = _make_conv_gelu_fc2_kernel(H, W)
    out = pl.pallas_call(
        kernel,
        out_shape=jax.ShapeDtypeStruct((B, HW, Np), out_dtype),
        grid=(B, Np // tn, Kp // tk),
        in_specs=[
            pl.BlockSpec((1, HW, tk), lambda b, j, k: (b, 0, k)),
            pl.BlockSpec((3, 3, tk), lambda b, j, k: (0, 0, k)),
            pl.BlockSpec((1, tk), lambda b, j, k: (0, k)),
            pl.BlockSpec((tk, tn), lambda b, j, k: (k, j)),
            pl.BlockSpec((1, tn), lambda b, j, k: (0, j)),
        ],
        out_specs=pl.BlockSpec((1, HW, tn), lambda b, j, k: (b, 0, j)),
        scratch_shapes=[pltpu.VMEM((HW, tn), jnp.float32)],
        compiler_params=pltpu.CompilerParams(
            dimension_semantics=("parallel", "parallel", "arbitrary"),
            vmem_limit_bytes=_VMEM_LIMIT,
        ),
    )(hb, wdwb, bdwb, w2b, b2b)
    if Np != Nout:
        out = out[:, :, :Nout]
    return out


# ----------------------------------------------------------------------------
# Mlp forward: fc1 -> [dwconv + GELU + fc2 fused] ; dropout p=0 omitted.
# ----------------------------------------------------------------------------
def mlp_forward(x, H, W, params):
    B, N, Cin = x.shape
    hidden = params["w1"].shape[1]
    Cout = params["w2"].shape[1]

    h = linear(x.reshape(B * N, Cin), params["w1"], params["b1"])
    h = h.reshape(B, H * W, hidden)
    out = conv_gelu_fc2(h, params["wdw"], params["bdw"],
                        params["w2"], params["b2"], H, W, out_dtype=x.dtype)
    return out.reshape(B, N, Cout)


def init_params(key, in_features, hidden_features, out_features):
    k1, k2, k3, k4, k5, k6 = jax.random.split(key, 6)
    s1 = 1.0 / math.sqrt(in_features)
    s2 = 1.0 / math.sqrt(hidden_features)
    return {
        # Linear weights stored as (in, out) — transpose of PyTorch's (out, in).
        "w1": jax.random.uniform(k1, (in_features, hidden_features), jnp.float32, -s1, s1),
        "b1": jax.random.uniform(k2, (hidden_features,), jnp.float32, -s1, s1),
        # Depthwise conv: PyTorch weight is (C, 1, 3, 3); stored here as (3, 3, C).
        "wdw": jax.random.uniform(k3, (3, 3, hidden_features), jnp.float32, -1.0 / 3.0, 1.0 / 3.0),
        "bdw": jax.random.uniform(k4, (hidden_features,), jnp.float32, -1.0 / 3.0, 1.0 / 3.0),
        "w2": jax.random.uniform(k5, (hidden_features, out_features), jnp.float32, -s2, s2),
        "b2": jax.random.uniform(k6, (out_features,), jnp.float32, -s2, s2),
    }


if __name__ == "__main__":
    key = jax.random.PRNGKey(0)
    B, H, W = 2, 8, 8
    in_features, hidden_features = 64, 128   # lane-dense hidden dim
    N = H * W

    kx, kp = jax.random.split(key)
    x = jax.random.normal(kx, (B, N, in_features), jnp.float32)
    params = init_params(kp, in_features, hidden_features, in_features)

    out = mlp_forward(x, H, W, params)
    out = jax.block_until_ready(out)
    assert out.shape == (B, N, in_features)

    # Pure-JAX f32 reference (same math, no Pallas).
    h_ref = x.reshape(B * N, in_features) @ params["w1"] + params["b1"]
    h_ref = h_ref.reshape(B, H, W, hidden_features)
    hp = jnp.pad(h_ref, ((0, 0), (1, 1), (1, 1), (0, 0)))
    acc = jnp.zeros_like(h_ref)
    for dy in range(3):
        for dx in range(3):
            acc = acc + hp[:, dy:dy + H, dx:dx + W, :] * params["wdw"][dy, dx, :]
    acc = acc + params["bdw"]
    g = 0.5 * acc * (1.0 + lax.erf(acc / jnp.sqrt(2.0)))
    ref = g.reshape(B * N, hidden_features) @ params["w2"] + params["b2"]
    ref = ref.reshape(B, N, in_features)

    # Kernel uses bf16 MXU operands (f32 accumulation) -> bf16-appropriate tolerance.
    max_err = float(jnp.max(jnp.abs(out - ref)))
    assert jnp.allclose(out, ref, atol=2e-2, rtol=2e-2), f"max abs err = {max_err}"

    print("KERNEL_OK")
</pallas_src>

<mosaic_0001>
module attributes {stable_mosaic.version = 11 : i64} {
  func.func @_linear_kernel(%arg0: i32, %arg1: i32, %arg2: i32, %arg3: memref<128x64xbf16, #tpu.memory_space<vmem>>, %arg4: memref<64x128xbf16, #tpu.memory_space<vmem>>, %arg5: memref<1x128xf32, #tpu.memory_space<vmem>>, %arg6: memref<128x128xf32, #tpu.memory_space<vmem>>, %arg7: memref<128x128xf32, #tpu.memory_space<vmem>>) attributes {dimension_semantics = [#tpu.dimension_semantics<parallel>, #tpu.dimension_semantics<parallel>, #tpu.dimension_semantics<arbitrary>], iteration_bounds = array<i64: 1, 1, 1>, scalar_prefetch = 0 : i64, scratch_operands = 1 : i64, tpu.core_type = #tpu.core_type<tc>, window_params = [{transform_indices = @transform_0, window_bounds = array<i64: 128, 64>}, {transform_indices = @transform_1, window_bounds = array<i64: 64, 128>}, {transform_indices = @transform_2, window_bounds = array<i64: 1, 128>}, {transform_indices = @transform_3, window_bounds = array<i64: 128, 128>}]} {
    %c0_i32 = arith.constant 0 : i32
    %0 = arith.cmpi eq, %arg2, %c0_i32 : i32
    %1 = arith.extui %0 : i1 to i32
    %c0_i32_0 = arith.constant 0 : i32
    %2 = arith.cmpi ne, %1, %c0_i32_0 : i32
    scf.if %2 {
      %cst_10 = arith.constant 0.000000e+00 : f32
      %12 = vector.broadcast %cst_10 : f32 to vector<128x128xf32>
      %c0_11 = arith.constant 0 : index
      %c0_12 = arith.constant 0 : index
      %13 = vector.load %arg7[%c0_11, %c0_12] : memref<128x128xf32, #tpu.memory_space<vmem>>, vector<128x128xf32>
      tpu.vector_store %arg7[%c0_11, %c0_12], %12 {strides = array<i32>} : memref<128x128xf32, #tpu.memory_space<vmem>>, vector<128x128xf32>,
    } else {
    }
    %c0 = arith.constant 0 : index
    %c0_1 = arith.constant 0 : index
    %3 = vector.load %arg7[%c0, %c0_1] : memref<128x128xf32, #tpu.memory_space<vmem>>, vector<128x128xf32>
    %c0_2 = arith.constant 0 : index
    %c0_3 = arith.constant 0 : index
    %4 = vector.load %arg3[%c0_2, %c0_3] : memref<128x64xbf16, #tpu.memory_space<vmem>>, vector<128x64xbf16>
    %c0_4 = arith.constant 0 : index
    %c0_5 = arith.constant 0 : index
    %5 = vector.load %arg4[%c0_4, %c0_5] : memref<64x128xbf16, #tpu.memory_space<vmem>>, vector<64x128xbf16>
    %cst = arith.constant dense<0.000000e+00> : vector<128x128xf32>
    %6 = tpu.matmul %4, %5, %cst {dimension_numbers = #tpu.dot_dimension_numbers<[1], [0], [0], [1], [0, 0, 1, 1], [], []>} : vector<128x64xbf16>, vector<64x128xbf16>, vector<128x128xf32> -> vector<128x128xf32>
    %7 = arith.addf %3, %6 : vector<128x128xf32>
    %c0_6 = arith.constant 0 : index
    %c0_7 = arith.constant 0 : index
    %8 = vector.load %arg7[%c0_6, %c0_7] : memref<128x128xf32, #tpu.memory_space<vmem>>, vector<128x128xf32>
    tpu.vector_store %arg7[%c0_6, %c0_7], %7 {strides = array<i32>} : memref<128x128xf32, #tpu.memory_space<vmem>>, vector<128x128xf32>,
    %c0_i32_8 = arith.constant 0 : i32
    %9 = arith.cmpi eq, %arg2, %c0_i32_8 : i32
    %10 = arith.extui %9 : i1 to i32
    %c0_i32_9 = arith.constant 0 : i32
    %11 = arith.cmpi ne, %10, %c0_i32_9 : i32
    scf.if %11 {
      %c0_10 = arith.constant 0 : index
      %c0_11 = arith.constant 0 : index
      %12 = vector.load %arg7[%c0_10, %c0_11] : memref<128x128xf32, #tpu.memory_space<vmem>>, vector<128x128xf32>
      %c0_12 = arith.constant 0 : index
      %c0_13 = arith.constant 0 : index
      %13 = vector.load %arg5[%c0_12, %c0_13] : memref<1x128xf32, #tpu.memory_space<vmem>>, vector<1x128xf32>
      %14 = vector.broadcast %13 : vector<1x128xf32> to vector<128x128xf32>
      %15 = arith.addf %12, %14 : vector<128x128xf32>
      %c0_14 = arith.constant 0 : index
      %c0_15 = arith.constant 0 : index
      %16 = vector.load %arg6[%c0_14, %c0_15] : memref<128x128xf32, #tpu.memory_space<vmem>>, vector<128x128xf32>
      tpu.vector_store %arg6[%c0_14, %c0_15], %15 {strides = array<i32>} : memref<128x128xf32, #tpu.memory_space<vmem>>, vector<128x128xf32>,
    } else {
    }
    return
  }
  func.func @transform_0(%arg0: i32, %arg1: i32, %arg2: i32) -> (i32, i32) {
    %c0_i32 = arith.constant 0 : i32
    return %arg0, %arg2 : i32, i32
  }
  func.func @transform_1(%arg0: i32, %arg1: i32, %arg2: i32) -> (i32, i32) {
    %c0_i32 = arith.constant 0 : i32
    return %arg2, %arg1 : i32, i32
  }
  func.func @transform_2(%arg0: i32, %arg1: i32, %arg2: i32) -> (i32, i32) {
    %c0_i32 = arith.constant 0 : i32
    %c0_i32_0 = arith.constant 0 : i32
    return %c0_i32, %arg1 : i32, i32
  }
  func.func @transform_3(%arg0: i32, %arg1: i32, %arg2: i32) -> (i32, i32) {
    %c0_i32 = arith.constant 0 : i32
    return %arg0, %arg1 : i32, i32
  }
}

</mosaic_0001>

<llo_original>
// kernel: tpu_custom_call.1
$region0: #{tpu_custom_call.1}
  #allocation0 [shape = 'u32[]', space=smem, size = 0x4, offset = 0x4, fixed_abs, tag = 'smem constant byte address 0x4 - core index']
  #allocation1 [shape = 'u32[144,128]{1,0:T(1,128)}', space=vmem, size = 0x12000, scoped, tag = 'internal scratch']
  #allocation2 [shape = 'f32[128,128]{1,0:T(8,128)}', space=vmem, size = 0x10000, scoped, tag = 'scratch operand']
  %s0 = inlined_call_operand.vmem [shape: bf16[128,64], index: 0, kind: input, shape index: {}]
  %s1 = inlined_call_operand.vmem [shape: bf16[64,128], index: 1, kind: input, shape index: {}]
  %s2 = inlined_call_operand.vmem [shape: f32[1,128], index: 2, kind: input, shape index: {}]
  %s3 = inlined_call_operand.hbm [shape: f32[128,128], index: 3, kind: output, shape index: {}]
  %s4 = sld [smem:[#allocation0]]
  $region30: #{tpu_custom_call.1} parent=0
    _
  %s6 = ssub.s32 1, %s4
  %s7 = scalar_select 0, %s6, %s4
  $region1: #{tpu_custom_call.1} parent=0
    #allocation3 [shape = 'u8[65536]{0}', space=vmem, size = 0x10000, scoped, tag = 'output window, operand 0, single buffered']
    #allocation4 [shape = 's32[1]{0}', space=sflag, size = 0x4, scoped, tag = 'scoped memory for tpu_custom_call.1']
    %8 = vsyncpa [#allocation4], 0
    // Predicated region
    $region2: #{tpu_custom_call.1} parent=1 // pred_check
      _
    $region3: #{tpu_custom_call.1} parent=1 // pred_check_branch
      %10 = sbr.rel (0) target = $region5
    $region4: #{tpu_custom_call.1} parent=1 // pred_region
      _
    $region5: #{tpu_custom_call.1} parent=1 // pred_fallthru
      _
    // Predicated region
    $region6: #{tpu_custom_call.1} parent=1 // pred_check
      _
    $region7: #{tpu_custom_call.1} parent=1 // pred_check_branch
      %12 = sbr.rel (0) target = $region9
    $region8: #{tpu_custom_call.1} parent=1 // pred_region
      _
    $region9: #{tpu_custom_call.1} parent=1 // pred_fallthru
      _
    // Predicated region
    $region10: #{tpu_custom_call.1} parent=1 // pred_check
      _
    $region11: #{tpu_custom_call.1} parent=1 // pred_check_branch
      %14 = sbr.rel (0) target = $region13
    $region12: #{tpu_custom_call.1} parent=1 // pred_region
      _
    $region13: #{tpu_custom_call.1} parent=1 // pred_fallthru
      _
    %p16 = scmp.eq.s32.totalorder 0, 0
    // Predicated region
    $region14: #{tpu_custom_call.1} parent=1 // pred_check
      %p17 = pneg %p16
    $region15: #{tpu_custom_call.1} parent=1 // pred_check_branch
      %19 = sbr.rel (%p17) target = $region17
    $region16: #{tpu_custom_call.1} parent=1 // pred_region
      %20 = vst [vmem:[#allocation2] sm:$0xff] 0.0
      %21 = vst [vmem:[#allocation2 + $0x8] sm:$0xff] 0.0
      %22 = vst [vmem:[#allocation2 + $0x10] sm:$0xff] 0.0
      %23 = vst [vmem:[#allocation2 + $0x18] sm:$0xff] 0.0
      %24 = vst [vmem:[#allocation2 + $0x20] sm:$0xff] 0.0
      %25 = vst [vmem:[#allocation2 + $0x28] sm:$0xff] 0.0
      %26 = vst [vmem:[#allocation2 + $0x30] sm:$0xff] 0.0
      %27 = vst [vmem:[#allocation2 + $0x38] sm:$0xff] 0.0
      %28 = vst [vmem:[#allocation2 + $0x40] sm:$0xff] 0.0
      %29 = vst [vmem:[#allocation2 + $0x48] sm:$0xff] 0.0
      %30 = vst [vmem:[#allocation2 + $0x50] sm:$0xff] 0.0
      %31 = vst [vmem:[#allocation2 + $0x58] sm:$0xff] 0.0
      %32 = vst [vmem:[#allocation2 + $0x60] sm:$0xff] 0.0
      %33 = vst [vmem:[#allocation2 + $0x68] sm:$0xff] 0.0
      %34 = vst [vmem:[#allocation2 + $0x70] sm:$0xff] 0.0
      %35 = vst [vmem:[#allocation2 + $0x78] sm:$0xff] 0.0
    $region17: #{tpu_custom_call.1} parent=1 // pred_fallthru
      _
    %v36 = vld [vmem:[#allocation2] sm:$0xff]
    %v37 = vld [vmem:[#allocation2 + $0x8] sm:$0xff]
    %v38 = vld [vmem:[#allocation2 + $0x10] sm:$0xff]
    %v39 = vld [vmem:[#allocation2 + $0x18] sm:$0xff]
    %v40 = vld [vmem:[#allocation2 + $0x20] sm:$0xff]
    %v41 = vld [vmem:[#allocation2 + $0x28] sm:$0xff]
    %v42 = vld [vmem:[#allocation2 + $0x30] sm:$0xff]
    %v43 = vld [vmem:[#allocation2 + $0x38] sm:$0xff]
    %v44 = vld [vmem:[#allocation2 + $0x40] sm:$0xff]
    %v45 = vld [vmem:[#allocation2 + $0x48] sm:$0xff]
    %v46 = vld [vmem:[#allocation2 + $0x50] sm:$0xff]
    %v47 = vld [vmem:[#allocation2 + $0x58] sm:$0xff]
    %v48 = vld [vmem:[#allocation2 + $0x60] sm:$0xff]
    %v49 = vld [vmem:[#allocation2 + $0x68] sm:$0xff]
    %v50 = vld [vmem:[#allocation2 + $0x70] sm:$0xff]
    %v51 = vld [vmem:[#allocation2 + $0x78] sm:$0xff]
    %v52 = vld [vmem:[%s0] sm:$0xf]
    %v53 = vld [vmem:[%s0 + $0x4] sm:$0xf]
    %v54 = vld [vmem:[%s0 + $0x8] sm:$0xf]
    %v55 = vld [vmem:[%s0 + $0xc] sm:$0xf]
    %v56 = vld [vmem:[%s0 + $0x10] sm:$0xf]
    %v57 = vld [vmem:[%s0 + $0x14] sm:$0xf]
    %v58 = vld [vmem:[%s0 + $0x18] sm:$0xf]
    %v59 = vld [vmem:[%s0 + $0x1c] sm:$0xf]
    %v60 = vld [vmem:[%s0 + $0x20] sm:$0xf]
    %v61 = vld [vmem:[%s0 + $0x24] sm:$0xf]
    %v62 = vld [vmem:[%s0 + $0x28] sm:$0xf]
    %v63 = vld [vmem:[%s0 + $0x2c] sm:$0xf]
    %v64 = vld [vmem:[%s0 + $0x30] sm:$0xf]
    %v65 = vld [vmem:[%s0 + $0x34] sm:$0xf]
    %v66 = vld [vmem:[%s0 + $0x38] sm:$0xf]
    %v67 = vld [vmem:[%s0 + $0x3c] sm:$0xf]
    %v68 = vld [vmem:[%s1] sm:$0xf]
    %v69 = vld [vmem:[%s1 + $0x4] sm:$0xf]
    %v70 = vld [vmem:[%s1 + $0x8] sm:$0xf]
    %v71 = vld [vmem:[%s1 + $0xc] sm:$0xf]
    %v72 = vld [vmem:[%s1 + $0x10] sm:$0xf]
    %v73 = vld [vmem:[%s1 + $0x14] sm:$0xf]
    %v74 = vld [vmem:[%s1 + $0x18] sm:$0xf]
    %v75 = vld [vmem:[%s1 + $0x1c] sm:$0xf]
    %v92 = vunpack.c.l.b16 %v52
    %v93 = vunpack.c.l.b16 %v53
    %v94 = vunpack.c.l.b16 %v54
    %v95 = vunpack.c.l.b16 %v55
    %v96 = vunpack.c.l.b16 %v56
    %v97 = vunpack.c.l.b16 %v57
    %v98 = vunpack.c.l.b16 %v58
    %v99 = vunpack.c.l.b16 %v59
    %v100 = vunpack.c.l.b16 %v60
    %v101 = vunpack.c.l.b16 %v61
    %v102 = vunpack.c.l.b16 %v62
    %v103 = vunpack.c.l.b16 %v63
    %v104 = vunpack.c.l.b16 %v64
    %v105 = vunpack.c.l.b16 %v65
    %v106 = vunpack.c.l.b16 %v66
    %v107 = vunpack.c.l.b16 %v67
    %v108 = vpack.c.b16 %v93, %v92
    %v109 = vpack.c.b16 %v95, %v94
    %v110 = vpack.c.b16 %v97, %v96
    %v111 = vpack.c.b16 %v99, %v98
    %v112 = vpack.c.b16 %v101, %v100
    %v113 = vpack.c.b16 %v103, %v102
    %v114 = vpack.c.b16 %v105, %v104
    %v115 = vpack.c.b16 %v107, %v106
    %v124 = vunpack.c.l.b16 %v68
    %v125 = vunpack.c.l.b16 %v69
    %v126 = vunpack.c.l.b16 %v70
    %v127 = vunpack.c.l.b16 %v71
    %v128 = vunpack.c.l.b16 %v72
    %v129 = vunpack.c.l.b16 %v73
    %v130 = vunpack.c.l.b16 %v74
    %v131 = vunpack.c.l.b16 %v75
    %v132 = vpack.c.b16 %v125, %v124
    %v133 = vpack.c.b16 %v127, %v126
    %v134 = vpack.c.b16 %v129, %v128
    %v135 = vpack.c.b16 %v131, %v130
    %vm140 = vcmask 523264
    %v142 = vsel %vm140, %v108, 0
    %v145 = vsel %vm140, %v109, 0
    %v148 = vsel %vm140, %v110, 0
    %v151 = vsel %vm140, %v111, 0
    %v154 = vsel %vm140, %v112, 0
    %v157 = vsel %vm140, %v113, 0
    %v160 = vsel %vm140, %v114, 0
    %v163 = vsel %vm140, %v115, 0
    %165 = vmatprep.subr.bf16.mxu0 0
    %166 = vmatpush1.bf16.msra.mxu0 %v132
    %167 = vmatprep.subr.bf16.mxu0 0
    %168 = vmatpush1.bf16.msra.mxu0 %v133
    %169 = vmatprep.subr.bf16.mxu0 0
    %170 = vmatpush1.bf16.msra.mxu0 %v134
    %171 = vmatprep.subr.bf16.mxu0 0
    %172 = vmatpush1.bf16.msra.mxu0 %v135
    %173 = vmatprep.subr.bf16.mxu0 0
    %174 = vmatpush1.bf16.msra.mxu0 0
    %175 = vmatprep.subr.bf16.mxu0 0
    %176 = vmatpush1.bf16.msra.mxu0 0
    %177 = vmatprep.subr.bf16.mxu0 0
    %178 = vmatpush1.bf16.msra.mxu0 0
    %179 = vmatprep.subr.bf16.mxu0 0
    %180 = vmatpush1.bf16.msra.mxu0 0
    %181 = vmatprep.subr.bf16.mxu0 0
    %182 = vmatpush1.bf16.msra.mxu0 0
    %183 = vmatprep.subr.bf16.mxu0 0
    %184 = vmatpush1.bf16.msra.mxu0 0
    %185 = vmatprep.subr.bf16.mxu0 0
    %186 = vmatpush1.bf16.msra.mxu0 0
    %187 = vmatprep.subr.bf16.mxu0 0
    %188 = vmatpush1.bf16.msra.mxu0 0
    %189 = vmatprep.subr.bf16.mxu0 0
    %190 = vmatpush1.bf16.msra.mxu0 0
    %191 = vmatprep.subr.bf16.mxu0 0
    %192 = vmatpush1.bf16.msra.mxu0 0
    %193 = vmatprep.subr.bf16.mxu0 0
    %194 = vmatpush1.bf16.msra.mxu0 0
    %195 = vmatprep.subr.bf16.mxu0 0
    %196 = vmatpush1.bf16.msra.mxu0 0
    %197 = vmatprep.mubr.bf16.mxu0 0
    %198 = vmatmul.mubr.bf16.gmra.mrb[0].mxu0 %v142
    %v199 = vpop.f32.mrb[0].mxu0
    %v200 = vadd.f32 0.0, %v199
    %v201 = vpop.f32.mrb[0].mxu0
    %v202 = vpop.f32.mrb[0].mxu0
    %v203 = vadd.f32 0.0, %v202
    %v204 = vpop.f32.mrb[0].mxu0
    %205 = vmatprep.mubr.bf16.mxu0 0
    %206 = vmatmul.mubr.bf16.gmra.mrb[0].mxu0 %v145
    %v207 = vpop.f32.mrb[0].mxu0
    %v208 = vadd.f32 0.0, %v207
    %v209 = vpop.f32.mrb[0].mxu0
    %v210 = vpop.f32.mrb[0].mxu0
    %v211 = vadd.f32 0.0, %v210
    %v212 = vpop.f32.mrb[0].mxu0
    %213 = vmatprep.mubr.bf16.mxu0 0
    %214 = vmatmul.mubr.bf16.gmra.mrb[0].mxu0 %v148
    %v215 = vpop.f32.mrb[0].mxu0
    %v216 = vadd.f32 0.0, %v215
    %v217 = vpop.f32.mrb[0].mxu0
    %v218 = vpop.f32.mrb[0].mxu0
    %v219 = vadd.f32 0.0, %v218
    %v220 = vpop.f32.mrb[0].mxu0
    %221 = vmatprep.mubr.bf16.mxu0 0
    %222 = vmatmul.mubr.bf16.gmra.mrb[0].mxu0 %v151
    %v223 = vpop.f32.mrb[0].mxu0
    %v224 = vadd.f32 0.0, %v223
    %v225 = vpop.f32.mrb[0].mxu0
    %v226 = vpop.f32.mrb[0].mxu0
    %v227 = vadd.f32 0.0, %v226
    %v228 = vpop.f32.mrb[0].mxu0
    %229 = vmatprep.mubr.bf16.mxu0 0
    %230 = vmatmul.mubr.bf16.gmra.mrb[0].mxu0 %v154
    %v231 = vpop.f32.mrb[0].mxu0
    %v232 = vadd.f32 0.0, %v231
    %v233 = vpop.f32.mrb[0].mxu0
    %v234 = vpop.f32.mrb[0].mxu0
    %v235 = vadd.f32 0.0, %v234
    %v236 = vpop.f32.mrb[0].mxu0
    %237 = vmatprep.mubr.bf16.mxu0 0
    %238 = vmatmul.mubr.bf16.gmra.mrb[0].mxu0 %v157
    %v239 = vpop.f32.mrb[0].mxu0
    %v240 = vadd.f32 0.0, %v239
    %v241 = vpop.f32.mrb[0].mxu0
    %v242 = vpop.f32.mrb[0].mxu0
    %v243 = vadd.f32 0.0, %v242
    %v244 = vpop.f32.mrb[0].mxu0
    %245 = vmatprep.mubr.bf16.mxu0 0
    %246 = vmatmul.mubr.bf16.gmra.mrb[0].mxu0 %v160
    %v247 = vpop.f32.mrb[0].mxu0
    %v248 = vadd.f32 0.0, %v247
    %v249 = vpop.f32.mrb[0].mxu0
    %v250 = vpop.f32.mrb[0].mxu0
    %v251 = vadd.f32 0.0, %v250
    %v252 = vpop.f32.mrb[0].mxu0
    %253 = vmatprep.mubr.bf16.mxu0 0
    %254 = vmatmul.mubr.bf16.gmra.mrb[0].mxu0 %v163
    %v255 = vpop.f32.mrb[0].mxu0
    %v256 = vadd.f32 0.0, %v255
    %v257 = vpop.f32.mrb[0].mxu0
    %v258 = vpop.f32.mrb[0].mxu0
    %v259 = vadd.f32 0.0, %v258
    %v260 = vpop.f32.mrb[0].mxu0
    %261 = vdwg.mxu0
    %v262 = vadd.f32 %v36, %v200
    %v263 = vadd.f32 %v37, %v203
    %v264 = vadd.f32 %v38, %v208
    %v265 = vadd.f32 %v39, %v211
    %v266 = vadd.f32 %v40, %v216
    %v267 = vadd.f32 %v41, %v219
    %v268 = vadd.f32 %v42, %v224
    %v269 = vadd.f32 %v43, %v227
    %v270 = vadd.f32 %v44, %v232
    %v271 = vadd.f32 %v45, %v235
    %v272 = vadd.f32 %v46, %v240
    %v273 = vadd.f32 %v47, %v243
    %v274 = vadd.f32 %v48, %v248
    %v275 = vadd.f32 %v49, %v251
    %v276 = vadd.f32 %v50, %v256
    %v277 = vadd.f32 %v51, %v259
    %278 = vst [vmem:[#allocation2] sm:$0xff] %v262
    %279 = vst [vmem:[#allocation2 + $0x8] sm:$0xff] %v263
    %280 = vst [vmem:[#allocation2 + $0x10] sm:$0xff] %v264
    %281 = vst [vmem:[#allocation2 + $0x18] sm:$0xff] %v265
    %282 = vst [vmem:[#allocation2 + $0x20] sm:$0xff] %v266
    %283 = vst [vmem:[#allocation2 + $0x28] sm:$0xff] %v267
    %284 = vst [vmem:[#allocation2 + $0x30] sm:$0xff] %v268
    %285 = vst [vmem:[#allocation2 + $0x38] sm:$0xff] %v269
    %286 = vst [vmem:[#allocation2 + $0x40] sm:$0xff] %v270
    %287 = vst [vmem:[#allocation2 + $0x48] sm:$0xff] %v271
    %288 = vst [vmem:[#allocation2 + $0x50] sm:$0xff] %v272
    %289 = vst [vmem:[#allocation2 + $0x58] sm:$0xff] %v273
    %290 = vst [vmem:[#allocation2 + $0x60] sm:$0xff] %v274
    %291 = vst [vmem:[#allocation2 + $0x68] sm:$0xff] %v275
    %292 = vst [vmem:[#allocation2 + $0x70] sm:$0xff] %v276
    %293 = vst [vmem:[#allocation2 + $0x78] sm:$0xff] %v277
    // Predicated region
    $region18: #{tpu_custom_call.1} parent=1 // pred_check
      %p294 = pneg %p16
    $region19: #{tpu_custom_call.1} parent=1 // pred_check_branch
      %296 = sbr.rel (%p294) target = $region21
    $region20: #{tpu_custom_call.1} parent=1 // pred_region
      %v297 = vld [vmem:[#allocation2] sm:$0xff]
      %v298 = vld [vmem:[#allocation2 + $0x8] sm:$0xff]
      %v299 = vld [vmem:[#allocation2 + $0x10] sm:$0xff]
      %v300 = vld [vmem:[#allocation2 + $0x18] sm:$0xff]
      %v301 = vld [vmem:[#allocation2 + $0x20] sm:$0xff]
      %v302 = vld [vmem:[#allocation2 + $0x28] sm:$0xff]
      %v303 = vld [vmem:[#allocation2 + $0x30] sm:$0xff]
      %v304 = vld [vmem:[#allocation2 + $0x38] sm:$0xff]
      %v305 = vld [vmem:[#allocation2 + $0x40] sm:$0xff]
      %v306 = vld [vmem:[#allocation2 + $0x48] sm:$0xff]
      %v307 = vld [vmem:[#allocation2 + $0x50] sm:$0xff]
      %v308 = vld [vmem:[#allocation2 + $0x58] sm:$0xff]
      %v309 = vld [vmem:[#allocation2 + $0x60] sm:$0xff]
      %v310 = vld [vmem:[#allocation2 + $0x68] sm:$0xff]
      %v311 = vld [vmem:[#allocation2 + $0x70] sm:$0xff]
      %v312 = vld [vmem:[#allocation2 + $0x78] sm:$0xff]
      %v313 = vld [vmem:[%s2] sm:$0x1]
      %v315 = vlaneseq
      %v316 = vshrl.u32 %v315, 7
      %v317 = vsub.s32 0, %v316
      %v318 = vrot.slane %v313, %v317
      %v320 = vadd.f32 %v297, %v318
      %v321 = vadd.f32 %v298, %v318
      %v322 = vadd.f32 %v299, %v318
      %v323 = vadd.f32 %v300, %v318
      %v324 = vadd.f32 %v301, %v318
      %v325 = vadd.f32 %v302, %v318
      %v326 = vadd.f32 %v303, %v318
      %v327 = vadd.f32 %v304, %v318
      %v328 = vadd.f32 %v305, %v318
      %v329 = vadd.f32 %v306, %v318
      %v330 = vadd.f32 %v307, %v318
      %v331 = vadd.f32 %v308, %v318
      %v332 = vadd.f32 %v309, %v318
      %v333 = vadd.f32 %v310, %v318
      %v334 = vadd.f32 %v311, %v318
      %v335 = vadd.f32 %v312, %v318
      %336 = vst [vmem:[#allocation3] sm:$0xff] %v320
      %337 = vst [vmem:[#allocation3 + $0x8] sm:$0xff] %v321
      %338 = vst [vmem:[#allocation3 + $0x10] sm:$0xff] %v322
      %339 = vst [vmem:[#allocation3 + $0x18] sm:$0xff] %v323
      %340 = vst [vmem:[#allocation3 + $0x20] sm:$0xff] %v324
      %341 = vst [vmem:[#allocation3 + $0x28] sm:$0xff] %v325
      %342 = vst [vmem:[#allocation3 + $0x30] sm:$0xff] %v326
      %343 = vst [vmem:[#allocation3 + $0x38] sm:$0xff] %v327
      %344 = vst [vmem:[#allocation3 + $0x40] sm:$0xff] %v328
      %345 = vst [vmem:[#allocation3 + $0x48] sm:$0xff] %v329
      %346 = vst [vmem:[#allocation3 + $0x50] sm:$0xff] %v330
      %347 = vst [vmem:[#allocation3 + $0x58] sm:$0xff] %v331
      %348 = vst [vmem:[#allocation3 + $0x60] sm:$0xff] %v332
      %349 = vst [vmem:[#allocation3 + $0x68] sm:$0xff] %v333
      %350 = vst [vmem:[#allocation3 + $0x70] sm:$0xff] %v334
      %351 = vst [vmem:[#allocation3 + $0x78] sm:$0xff] %v335
    $region21: #{tpu_custom_call.1} parent=1 // pred_fallthru
      _
    // Predicated region
    $region22: #{tpu_custom_call.1} parent=1 // pred_check
      _
    $region23: #{tpu_custom_call.1} parent=1 // pred_check_branch
      %353 = sbr.rel (0) target = $region25
    $region24: #{tpu_custom_call.1} parent=1 // pred_region
      %s355 = ssub.s32 2048, 2048
      %356 = vsyncadd [#allocation4], %s355
      %s357 = sshll.u32 [#allocation3], 4
      %s358 = int_to_ptr.vmem [resolvable:$true] %s357
      %363 = dma.vmem_to_hbm [thread:$0]  %s358, 2048, %s3, [#allocation4], 128, 128, 8
    $region25: #{tpu_custom_call.1} parent=1 // pred_fallthru
      _
    // Predicated region
    $region26: #{tpu_custom_call.1} parent=1 // pred_check
      _
    $region27: #{tpu_custom_call.1} parent=1 // pred_check_branch
      %365 = sbr.rel (0) target = $region29
    $region28: #{tpu_custom_call.1} parent=1 // pred_region
      %366 = dma.done [#allocation4], 2048
    $region29: #{tpu_custom_call.1} parent=1 // pred_fallthru
      _
    %367 = vsyncpa [#allocation4], 1

</llo_original>
